<compile_context>
chip_gen: v7x
topology: tpu7x:2x2x1
jax: 0.10.0
libtpu: 0.0.40
codegen_flags: <defaults>
</compile_context>

<pallas_src>
import functools
import math

import jax
import jax.numpy as jnp
from jax import lax
from jax.experimental import pallas as pl
from jax.experimental.pallas import tpu as pltpu

EPS = 1e-5
_VMEM_LIMIT = 32 * 1024 * 1024


def _round_up(x, m):
    return ((x + m - 1) // m) * m


# ----------------------- batch norm: pass 1 (statistics) ----------------------
def _bn_stats_kernel(x_ref, stats_ref, *, tile_n, n_valid, need_mask):
    i = pl.program_id(0)

    @pl.when(i == 0)
    def _():
        stats_ref[...] = jnp.zeros_like(stats_ref)

    x = x_ref[...].astype(jnp.float32)                          # (tile_n, E2)
    if need_mask:
        row = i * tile_n + lax.broadcasted_iota(jnp.int32, x.shape, 0)
        x = jnp.where(row < n_valid, x, 0.0)

    s = jnp.sum(x, axis=0, keepdims=True)                       # (1, E2)
    ss = jnp.sum(x * x, axis=0, keepdims=True)                  # (1, E2)
    stats_ref[...] = stats_ref[...] + jnp.concatenate([s, ss], axis=0)


# ------------------ batch norm: pass 2 (folded normalize+affine) --------------
def _bn_affine_kernel(x_ref, scale_ref, shift_ref, o_ref):
    x = x_ref[...].astype(jnp.float32)                          # (tile_n, E2)
    o_ref[...] = (x * scale_ref[...] + shift_ref[...]).astype(o_ref.dtype)


def batch_norm_1d(x_flat, gamma, beta):
    """x_flat: (N, E); gamma/beta: (E,). Training-mode BatchNorm1d forward."""
    N, E = x_flat.shape

    # Lane packing: fold g rows into the 128-lane axis when E < 128.
    if E < 128 and 128 % E == 0 and N % (128 // E) == 0:
        g = 128 // E
    else:
        g = 1
    N2, E2 = N // g, E * g
    x2 = x_flat.reshape(N2, E2)                                  # free (row-major)

    tile_n = min(1024, _round_up(N2, 8))
    grid_n = pl.cdiv(N2, tile_n)
    need_mask = (N2 % tile_n) != 0

    # ---- pass 1: per-lane sum / sum-of-squares (single streaming read) ----
    stats = pl.pallas_call(
        functools.partial(_bn_stats_kernel, tile_n=tile_n, n_valid=N2,
                          need_mask=need_mask),
        out_shape=jax.ShapeDtypeStruct((2, E2), jnp.float32),
        grid_spec=pltpu.PrefetchScalarGridSpec(
            num_scalar_prefetch=0,
            grid=(grid_n,),
            in_specs=[pl.BlockSpec((tile_n, E2), lambda i: (i, 0))],
            out_specs=pl.BlockSpec((2, E2), lambda i: (0, 0)),
        ),
        compiler_params=pltpu.CompilerParams(
            dimension_semantics=("arbitrary",),
            vmem_limit_bytes=_VMEM_LIMIT),
    )(x2)

    # ---- tiny host-side (XLA) combine: per-channel stats + folded affine ----
    sums = stats.reshape(2, g, E).sum(axis=1)                    # (2, E)
    mean = sums[0] / N
    var = jnp.maximum(sums[1] / N - mean * mean, 0.0)            # biased var
    scale = gamma.astype(jnp.float32) * lax.rsqrt(var + EPS)     # (E,)
    shift = beta.astype(jnp.float32) - mean * scale              # (E,)
    scale2 = jnp.tile(scale, g).reshape(1, E2)
    shift2 = jnp.tile(shift, g).reshape(1, E2)

    # ---- pass 2: y = x * scale + shift (parallel over row tiles) ----
    y2 = pl.pallas_call(
        _bn_affine_kernel,
        out_shape=jax.ShapeDtypeStruct((N2, E2), x_flat.dtype),
        grid_spec=pltpu.PrefetchScalarGridSpec(
            num_scalar_prefetch=0,
            grid=(grid_n,),
            in_specs=[
                pl.BlockSpec((tile_n, E2), lambda i: (i, 0)),
                pl.BlockSpec((1, E2), lambda i: (0, 0)),
                pl.BlockSpec((1, E2), lambda i: (0, 0)),
            ],
            out_specs=pl.BlockSpec((tile_n, E2), lambda i: (i, 0)),
        ),
        compiler_params=pltpu.CompilerParams(
            dimension_semantics=("parallel",),
            vmem_limit_bytes=_VMEM_LIMIT),
    )(x2, scale2, shift2)

    return y2.reshape(N, E)


# --------------------------- instance norm kernel ----------------------------
def _instance_norm_kernel(x_ref, gamma_ref, beta_ref, o_ref):
    # x_ref: (TILE_B, S, E); per-(sample, channel) stats over S.
    x = x_ref[...].astype(jnp.float32)
    mean = jnp.mean(x, axis=1, keepdims=True)                    # (TB, 1, E)
    xm = x - mean                                                # reused below
    var = jnp.mean(xm * xm, axis=1, keepdims=True)               # biased var
    scale = gamma_ref[...] * lax.rsqrt(var + EPS)                # (TB, 1, E)
    o_ref[...] = (xm * scale + beta_ref[...]).astype(o_ref.dtype)


def instance_norm_1d(x, gamma, beta):
    """x: (B, S, E); gamma/beta: (E,). Training-mode InstanceNorm1d forward."""
    B, S, E = x.shape
    bytes_per_sample = S * E * x.dtype.itemsize
    target = 2 * 1024 * 1024                                     # ~2 MiB blocks
    tile_b = max(1, min(B, target // max(1, bytes_per_sample)))
    grid_b = pl.cdiv(B, tile_b)

    g = gamma.reshape(1, 1, E).astype(jnp.float32)
    b = beta.reshape(1, 1, E).astype(jnp.float32)

    # NOTE: for E < 128 a lane-packing of the S axis (like the batch-norm path)
    # would further densify vregs; skipped here since production embed_dim=128.
    return pl.pallas_call(
        _instance_norm_kernel,
        out_shape=jax.ShapeDtypeStruct((B, S, E), x.dtype),
        grid_spec=pltpu.PrefetchScalarGridSpec(
            num_scalar_prefetch=0,
            grid=(grid_b,),
            in_specs=[
                pl.BlockSpec((tile_b, S, E), lambda i: (i, 0, 0)),
                pl.BlockSpec((1, 1, E), lambda i: (0, 0, 0)),
                pl.BlockSpec((1, 1, E), lambda i: (0, 0, 0)),
            ],
            out_specs=pl.BlockSpec((tile_b, S, E), lambda i: (i, 0, 0)),
        ),
        compiler_params=pltpu.CompilerParams(
            dimension_semantics=("parallel",),
            vmem_limit_bytes=_VMEM_LIMIT),
    )(x, g, b)


# ------------------------------- module wrapper -------------------------------
class Normalization:
    # TODO(synk): only training-mode forward is implemented; BatchNorm1d
    # running-stats (running_mean/var) tracking and eval mode are not.
    def __init__(self, embed_dim, normalization='batch', key=None):
        assert normalization in ('batch', 'instance')
        self.embed_dim = embed_dim
        self.normalization = normalization
        if key is None:
            key = jax.random.PRNGKey(42)
        stdv = 1.0 / math.sqrt(embed_dim)
        k1, k2 = jax.random.split(key)
        self.weight = jax.random.uniform(
            k1, (embed_dim,), jnp.float32, minval=-stdv, maxval=stdv)
        self.bias = jax.random.uniform(
            k2, (embed_dim,), jnp.float32, minval=-stdv, maxval=stdv)

    def _apply(self, x):
        B, S, E = x.shape
        assert E == self.embed_dim
        if self.normalization == 'batch':
            y = batch_norm_1d(x.reshape(B * S, E), self.weight, self.bias)
            return y.reshape(B, S, E)
        return instance_norm_1d(x, self.weight, self.bias)

    def __call__(self, x):
        # Mirrors the PyTorch module's list handling (normalizes element 0).
        if isinstance(x, list):
            return [self._apply(x[0])] + list(x[1:])
        return self._apply(x)


# ------------------------------ pure-JAX reference ----------------------------
def _ref_batch(x, gamma, beta):
    B, S, E = x.shape
    xf = x.reshape(B * S, E).astype(jnp.float32)
    mean = xf.mean(axis=0, keepdims=True)
    var = ((xf - mean) ** 2).mean(axis=0, keepdims=True)
    y = (xf - mean) / jnp.sqrt(var + EPS) * gamma + beta
    return y.reshape(B, S, E)


def _ref_instance(x, gamma, beta):
    xf = x.astype(jnp.float32)
    mean = xf.mean(axis=1, keepdims=True)
    var = ((xf - mean) ** 2).mean(axis=1, keepdims=True)
    return (xf - mean) / jnp.sqrt(var + EPS) * gamma + beta


def _check(B, S, E, seed):
    key = jax.random.PRNGKey(seed)
    kx, kp1, kp2 = jax.random.split(key, 3)
    x = jax.random.normal(kx, (B, S, E), jnp.float32) * 2.0 + 0.5

    norm_b = Normalization(E, 'batch', key=kp1)
    y_b = jax.block_until_ready(norm_b(x))
    ref_b = _ref_batch(x, norm_b.weight, norm_b.bias)
    assert jnp.allclose(y_b, ref_b, atol=1e-3, rtol=1e-3), \
        f"batch norm mismatch at B={B},S={S},E={E}"

    norm_i = Normalization(E, 'instance', key=kp2)
    y_i = jax.block_until_ready(norm_i(x))
    ref_i = _ref_instance(x, norm_i.weight, norm_i.bias)
    assert jnp.allclose(y_i, ref_i, atol=1e-3, rtol=1e-3), \
        f"instance norm mismatch at B={B},S={S},E={E}"


if __name__ == "__main__":
    # Small canonical shape (lane-packed path, single grid step).
    _check(B=2, S=8, E=32, seed=0)
    # Non-divisible rows -> exercises tail masking / fallback packing.
    _check(B=3, S=10, E=32, seed=0)
    # Larger case -> exercises multi-step accumulator grid + masking + packing.
    _check(B=64, S=80, E=32, seed=0)
    print("KERNEL_OK")
</pallas_src>

<mosaic_0001>
module attributes {stable_mosaic.version = 11 : i64} {
  func.func @_bn_stats_kernel(%arg0: i32, %arg1: memref<8x128xf32, #tpu.memory_space<vmem>>, %arg2: memref<2x128xf32, #tpu.memory_space<vmem>>) attributes {dimension_semantics = [#tpu.dimension_semantics<arbitrary>], iteration_bounds = array<i64: 1>, scalar_prefetch = 0 : i64, scratch_operands = 0 : i64, tpu.core_type = #tpu.core_type<tc>, window_params = [{transform_indices = @transform_0, window_bounds = array<i64: 8, 128>}, {pipeline_mode = #tpu.pipeline_mode<synchronous>, transform_indices = @transform_1, window_bounds = array<i64: 2, 128>}]} {
    %c0_i32 = arith.constant 0 : i32
    %0 = arith.cmpi eq, %arg0, %c0_i32 : i32
    %1 = arith.extui %0 : i1 to i32
    %c0_i32_0 = arith.constant 0 : i32
    %2 = arith.cmpi ne, %1, %c0_i32_0 : i32
    scf.if %2 {
      %cst_8 = arith.constant 0.000000e+00 : f32
      %21 = vector.broadcast %cst_8 : f32 to vector<2x128xf32>
      %c0_9 = arith.constant 0 : index
      %c0_10 = arith.constant 0 : index
      %22 = vector.load %arg2[%c0_9, %c0_10] : memref<2x128xf32, #tpu.memory_space<vmem>>, vector<2x128xf32>
      tpu.vector_store %arg2[%c0_9, %c0_10], %21 {strides = array<i32>} : memref<2x128xf32, #tpu.memory_space<vmem>>, vector<2x128xf32>,
    } else {
    }
    %c0 = arith.constant 0 : index
    %c0_1 = arith.constant 0 : index
    %3 = vector.load %arg1[%c0, %c0_1] : memref<8x128xf32, #tpu.memory_space<vmem>>, vector<8x128xf32>
    %c8_i32 = arith.constant 8 : i32
    %4 = arith.muli %arg0, %c8_i32 : i32
    %5 = tpu.iota {dimensions = array<i32: 0>} : vector<8x128xi32>
    %6 = vector.broadcast %4 : i32 to vector<8x128xi32>
    %7 = arith.addi %6, %5 : vector<8x128xi32>
    %c4_i32 = arith.constant 4 : i32
    %8 = vector.broadcast %c4_i32 : i32 to vector<8x128xi32>
    %9 = arith.cmpi slt, %7, %8 : vector<8x128xi32>
    %cst = arith.constant 0.000000e+00 : f32
    %10 = vector.broadcast %cst : f32 to vector<8x128xf32>
    %11 = arith.select %9, %3, %10 : vector<8x128xi1>, vector<8x128xf32>
    %cst_2 = arith.constant dense<0.000000e+00> : vector<128xf32>
    %12 = vector.multi_reduction <add>, %11, %cst_2 [0] : vector<8x128xf32> to vector<128xf32>
    %13 = vector.shape_cast %12 : vector<128xf32> to vector<1x128xf32>
    %14 = arith.mulf %11, %11 : vector<8x128xf32>
    %cst_3 = arith.constant dense<0.000000e+00> : vector<128xf32>
    %15 = vector.multi_reduction <add>, %14, %cst_3 [0] : vector<8x128xf32> to vector<128xf32>
    %16 = vector.shape_cast %15 : vector<128xf32> to vector<1x128xf32>
    %c0_4 = arith.constant 0 : index
    %c0_5 = arith.constant 0 : index
    %17 = vector.load %arg2[%c0_4, %c0_5] : memref<2x128xf32, #tpu.memory_space<vmem>>, vector<2x128xf32>
    %18 = tpu.concatenate %13, %16 in 0 : vector<1x128xf32>, vector<1x128xf32> -> vector<2x128xf32>
    %19 = arith.addf %17, %18 : vector<2x128xf32>
    %c0_6 = arith.constant 0 : index
    %c0_7 = arith.constant 0 : index
    %20 = vector.load %arg2[%c0_6, %c0_7] : memref<2x128xf32, #tpu.memory_space<vmem>>, vector<2x128xf32>
    tpu.vector_store %arg2[%c0_6, %c0_7], %19 {strides = array<i32>} : memref<2x128xf32, #tpu.memory_space<vmem>>, vector<2x128xf32>,
    return
  }
  func.func @transform_0(%arg0: i32) -> (i32, i32) {
    %c0_i32 = arith.constant 0 : i32
    %c0_i32_0 = arith.constant 0 : i32
    return %arg0, %c0_i32 : i32, i32
  }
  func.func @transform_1(%arg0: i32) -> (i32, i32) {
    %c0_i32 = arith.constant 0 : i32
    %c0_i32_0 = arith.constant 0 : i32
    %c0_i32_1 = arith.constant 0 : i32
    return %c0_i32, %c0_i32_0 : i32, i32
  }
}

</mosaic_0001>

<llo_original>
// kernel: tpu_custom_call.1
$region0: #{tpu_custom_call.1}
  #allocation0 [shape = 'u32[]', space=smem, size = 0x4, offset = 0x4, fixed_abs, tag = 'smem constant byte address 0x4 - core index']
  #allocation1 [shape = 'u32[144,128]{1,0:T(1,128)}', space=vmem, size = 0x12000, scoped, tag = 'internal scratch']
  %s0 = inlined_call_operand.hbm [shape: f32[4,128], index: 0, kind: input, shape index: {}]
  %s1 = inlined_call_operand.hbm [shape: f32[2,128], index: 1, kind: output, shape index: {}]
  %s2 = sld [smem:[#allocation0]]
  $region22: #{tpu_custom_call.1} parent=0
    _
  %s4 = ssub.s32 1, %s2
  %s5 = scalar_select 0, %s4, %s2
  $region1: #{tpu_custom_call.1} parent=0
    #allocation2 [shape = 'u8[4096]{0}', space=vmem, size = 0x1000, scoped, tag = 'input window, operand 0, single buffered']
    #allocation3 [shape = 's32[1]{0}', space=sflag, size = 0x4, scoped, tag = 'scoped memory for tpu_custom_call.1']
    #allocation4 [shape = 's32[1]{0}', space=sflag, size = 0x4, scoped, tag = 'scoped memory for tpu_custom_call.1']
    #allocation5 [shape = 'u8[1024]{0}', space=vmem, size = 0x400, scoped, tag = 'output window, operand 0, single buffered']
    %6 = vsyncpa [#allocation3], 0
    %7 = vsyncpa [#allocation4], 0
    // Predicated region
    $region2: #{tpu_custom_call.1} parent=1 // pred_check
      _
    $region3: #{tpu_custom_call.1} parent=1 // pred_check_branch
      %9 = sbr.rel (0) target = $region5
    $region4: #{tpu_custom_call.1} parent=1 // pred_region
      %s11 = ssub.s32 128, 64
      %12 = vsyncadd [#allocation3], %s11
      %s13 = sshll.u32 [#allocation2], 4
      %s14 = int_to_ptr.vmem [resolvable:$true] %s13
      %19 = dma.hbm_to_vmem [thread:$0]  %s0, 64, %s14, [#allocation3], 64, 64, 4
    $region5: #{tpu_custom_call.1} parent=1 // pred_fallthru
      _
    // Predicated region
    $region6: #{tpu_custom_call.1} parent=1 // pred_check
      _
    $region7: #{tpu_custom_call.1} parent=1 // pred_check_branch
      %21 = sbr.rel (0) target = $region9
    $region8: #{tpu_custom_call.1} parent=1 // pred_region
      %22 = dma.done [#allocation3], 128
    $region9: #{tpu_custom_call.1} parent=1 // pred_fallthru
      _
    %p23 = scmp.eq.s32.totalorder 0, 0
    // Predicated region
    $region10: #{tpu_custom_call.1} parent=1 // pred_check
      %p24 = pneg %p23
    $region11: #{tpu_custom_call.1} parent=1 // pred_check_branch
      %26 = sbr.rel (%p24) target = $region13
    $region12: #{tpu_custom_call.1} parent=1 // pred_region
      %27 = vst [vmem:[#allocation5] sm:$0x3] 0.0
    $region13: #{tpu_custom_call.1} parent=1 // pred_fallthru
      _
    %v28 = vld [vmem:[#allocation2] sm:$0xff]
    %s29 = smul.u32 0, 8
    %v30 = vlaneseq
    %v31 = vshrl.u32 %v30, 7
    %v32 = vstv %s29
    %v33 = vadd.s32 %v32, %v31
    %vm34 = vcmp.lt.s32.totalorder %v33, 4
    %v35 = vsel %vm34, %v28, 0.0
    %v36 = vrot.slane %v35, 4
    %v37 = vadd.f32 %v35, %v36
    %v38 = vrot.slane %v37, 2
    %v39 = vadd.f32 %v37, %v38
    %v40 = vrot.slane %v39, 1
    %v41 = vadd.f32 %v39, %v40
    %v42 = vmul.f32 %v35, %v35
    %v43 = vrot.slane %v42, 4
    %v44 = vadd.f32 %v42, %v43
    %v45 = vrot.slane %v44, 2
    %v46 = vadd.f32 %v44, %v45
    %v47 = vrot.slane %v46, 1
    %v48 = vadd.f32 %v46, %v47
    %v49 = vld [vmem:[#allocation5] sm:$0x3]
    %vm50 = vcmask 1040384
    %v51 = vsel %vm50, %v41, %v48
    %v52 = vadd.f32 %v49, %v51
    %53 = vst [vmem:[#allocation5] sm:$0x3] %v52
    // Predicated region
    $region14: #{tpu_custom_call.1} parent=1 // pred_check
      _
    $region15: #{tpu_custom_call.1} parent=1 // pred_check_branch
      %55 = sbr.rel (0) target = $region17
    $region16: #{tpu_custom_call.1} parent=1 // pred_region
      %s57 = ssub.s32 32, 32
      %58 = vsyncadd [#allocation4], %s57
      %s60 = sshll.u32 [#allocation5], 4
      %s61 = int_to_ptr.vmem [resolvable:$true] %s60
      %63 = dma.vmem_to_hbm [thread:$0]  %s61, 32, %s1, [#allocation4]
    $region17: #{tpu_custom_call.1} parent=1 // pred_fallthru
      _
    // Predicated region
    $region18: #{tpu_custom_call.1} parent=1 // pred_check
      _
    $region19: #{tpu_custom_call.1} parent=1 // pred_check_branch
      %65 = sbr.rel (0) target = $region21
    $region20: #{tpu_custom_call.1} parent=1 // pred_region
      %66 = dma.done [#allocation4], 32
    $region21: #{tpu_custom_call.1} parent=1 // pred_fallthru
      _
    %67 = vsyncpa [#allocation3], 1
    %68 = vsyncpa [#allocation4], 1

</llo_original>
